<compile_context>
chip_gen: v5e
topology: v5e:2x2
jax: 0.10.0
libtpu: 0.0.40
codegen_flags: <defaults>
</compile_context>

<pallas_src>
import jax
import jax.numpy as jnp
import numpy as np
from jax.experimental import pallas as pl
from jax.experimental.pallas import tpu as pltpu

VMEM_LIMIT = 64 * 1024 * 1024  # fits v7x (64 MiB physical), harmless on v5e/v6e


def _hardswish_f32(z):
    return z * jnp.clip(z + 3.0, 0.0, 6.0) * (1.0 / 6.0)


# ---------------------------------------------------------------------------
# Kernel 1: 1x1 conv (as row-tiled matmul) + bias (BN pre-folded) + Hardswish
# ---------------------------------------------------------------------------
def pw_conv_bn_hswish_kernel(x_ref, w_ref, b_ref, o_ref):
    # x: (TM, Cin), w: (Cin, Cout) with BN scale folded in, b: (1, Cout) f32
    z = jnp.dot(x_ref[...], w_ref[...], preferred_element_type=jnp.float32)
    z = z + b_ref[...].astype(jnp.float32)
    o_ref[...] = _hardswish_f32(z).astype(o_ref.dtype)


def pw_conv_bn_hswish(x2d, w_fused, bias, *, tm=256):
    # tm: 512-1024 rows is a good production choice; 256 exercises the grid at
    # the small demo shapes while keeping double-buffered tiles tiny in VMEM.
    m, cin = x2d.shape
    cout = w_fused.shape[1]
    itemsize = x2d.dtype.itemsize
    cost = pl.CostEstimate(
        flops=2 * m * cin * cout,
        transcendentals=0,
        bytes_accessed=(m * cin + cin * cout + cout + m * cout) * itemsize,
    )
    return pl.pallas_call(
        pw_conv_bn_hswish_kernel,
        out_shape=jax.ShapeDtypeStruct((m, cout), x2d.dtype),
        grid_spec=pltpu.PrefetchScalarGridSpec(
            num_scalar_prefetch=0,
            grid=(pl.cdiv(m, tm),),
            in_specs=[
                pl.BlockSpec((tm, cin), lambda i: (i, 0)),
                pl.BlockSpec((cin, cout), lambda i: (0, 0)),
                pl.BlockSpec((1, cout), lambda i: (0, 0)),
            ],
            out_specs=pl.BlockSpec((tm, cout), lambda i: (i, 0)),
        ),
        compiler_params=pltpu.CompilerParams(
            dimension_semantics=("parallel",),
            vmem_limit_bytes=VMEM_LIMIT,
        ),
        cost_estimate=cost,
    )(x2d, w_fused, bias.reshape(1, cout).astype(jnp.float32))


# ---------------------------------------------------------------------------
# Kernel 2: fused SPPF max-pool cascade (5 -> 9 -> 13) + conv2 + BN + Hardswish
# ---------------------------------------------------------------------------
def sppf_conv2_kernel(y_ref, w2_ref, b2_ref, o_ref, ypad_ref):
    # y_ref:    (1, H, W, C1)    conv1 output for one batch element
    # w2_ref:   (4, C1, C2)      W2 split by SPP branch (BN scale folded in)
    # b2_ref:   (1, C2)          f32 bias
    # o_ref:    (1, H*W, C2)
    # ypad_ref: (1, H+4, W+4, C1) VMEM scratch with a -inf halo of 2
    _, h, w, c1 = y_ref.shape

    # -inf halo reproduces PyTorch MaxPool2d "same" padding semantics.
    ypad_ref[...] = jnp.full(ypad_ref.shape, -jnp.inf, ypad_ref.dtype)
    y = y_ref[...]
    ypad_ref[:, 2:2 + h, 2:2 + w, :] = y

    def pool5():
        # separable 5x5 stride-1 sliding max over the padded buffer
        yp = ypad_ref[...]
        acc_w = yp[:, :, 2:2 + w, :]
        for d in (-2, -1, 1, 2):
            acc_w = jnp.maximum(acc_w, yp[:, :, 2 + d:2 + d + w, :])
        acc = acc_w[:, 2:2 + h, :, :]
        for d in (-2, -1, 1, 2):
            acc = jnp.maximum(acc, acc_w[:, 2 + d:2 + d + h, :, :])
        return acc  # (1, h, w, c1)

    m5 = pool5()
    ypad_ref[:, 2:2 + h, 2:2 + w, :] = m5    # SPPF cascade: pool9  = pool5∘pool5
    m9 = pool5()
    ypad_ref[:, 2:2 + h, 2:2 + w, :] = m9    #               pool13 = pool5∘pool5∘pool5
    m13 = pool5()

    # conv2 without materialising the channel concat: accumulate the four
    # partial matmuls (one per SPP branch) in f32.
    mm = h * w
    acc = jnp.dot(y.reshape(mm, c1), w2_ref[0], preferred_element_type=jnp.float32)
    acc = acc + jnp.dot(m5.reshape(mm, c1), w2_ref[1], preferred_element_type=jnp.float32)
    acc = acc + jnp.dot(m9.reshape(mm, c1), w2_ref[2], preferred_element_type=jnp.float32)
    acc = acc + jnp.dot(m13.reshape(mm, c1), w2_ref[3], preferred_element_type=jnp.float32)
    z = acc + b2_ref[...].astype(jnp.float32)
    o_ref[0] = _hardswish_f32(z).astype(o_ref.dtype)


def sppf_conv2(y_nhwc, w2_fused, bias2):
    n, h, w, c1 = y_nhwc.shape
    c2 = w2_fused.shape[1]
    w2_blocks = w2_fused.reshape(4, c1, c2)   # free host-side reshape
    itemsize = y_nhwc.dtype.itemsize
    cost = pl.CostEstimate(
        flops=2 * n * h * w * (4 * c1) * c2,
        transcendentals=0,
        bytes_accessed=(n * h * w * c1 + 4 * c1 * c2 + c2 + n * h * w * c2) * itemsize,
    )
    return pl.pallas_call(
        sppf_conv2_kernel,
        out_shape=jax.ShapeDtypeStruct((n, h * w, c2), y_nhwc.dtype),
        grid_spec=pltpu.PrefetchScalarGridSpec(
            num_scalar_prefetch=0,
            grid=(n,),
            in_specs=[
                pl.BlockSpec((1, h, w, c1), lambda i: (i, 0, 0, 0)),
                pl.BlockSpec((4, c1, c2), lambda i: (0, 0, 0)),
                pl.BlockSpec((1, c2), lambda i: (0, 0)),
            ],
            out_specs=pl.BlockSpec((1, h * w, c2), lambda i: (i, 0, 0)),
            scratch_shapes=[pltpu.VMEM((1, h + 4, w + 4, c1), y_nhwc.dtype)],
        ),
        compiler_params=pltpu.CompilerParams(
            dimension_semantics=("parallel",),
            vmem_limit_bytes=VMEM_LIMIT,
        ),
        cost_estimate=cost,
    )(y_nhwc, w2_blocks, bias2.reshape(1, c2).astype(jnp.float32))


# ---------------------------------------------------------------------------
# SPP forward (glue in plain JAX)
# ---------------------------------------------------------------------------
def fold_bn(gamma, beta, mean, var, eps=1e-5):
    scale = gamma / jnp.sqrt(var + eps)
    bias = beta - mean * scale
    return scale, bias


def fold_bn_into_weight(w, gamma, beta, mean, var, eps=1e-5):
    scale, bias = fold_bn(gamma, beta, mean, var, eps)
    return (w * scale[None, :]).astype(w.dtype), bias.astype(jnp.float32)


def spp_forward(x_nchw, params):
    n, c_in, h, w = x_nchw.shape
    c1 = params["w1"].shape[1]
    c2 = params["w2"].shape[1]

    # Fold BN scale/shift into the conv weights once, on the host.
    w1f, b1 = fold_bn_into_weight(params["w1"], *params["bn1"])
    w2f, b2 = fold_bn_into_weight(params["w2"], *params["bn2"])

    # NCHW -> NHWC -> (M, Cin). (Could be folded into the first matmul as a
    # transposed-LHS contraction to save one HBM pass; kept in XLA for clarity.)
    x2d = jnp.transpose(x_nchw, (0, 2, 3, 1)).reshape(n * h * w, c_in)

    # conv1: c_in -> c_in // 2 (row-tiled, pipelined)
    y = pw_conv_bn_hswish(x2d, w1f, b1, tm=256).reshape(n, h, w, c1)

    # fused SPPF pools + conv2 (no pad tensor, no concat tensor in HBM)
    out = sppf_conv2(y, w2f, b2)                       # (N, H*W, c2)
    return out.reshape(n, h, w, c2).transpose(0, 3, 1, 2)   # back to NCHW


# ---------------------------------------------------------------------------
# Pure-JAX reference (for correctness check)
# ---------------------------------------------------------------------------
def _hardswish(z):
    return z * jnp.clip(z + 3.0, 0.0, 6.0) / 6.0


def _ref_pool(y_nhwc, k):
    p = k // 2
    return jax.lax.reduce_window(
        y_nhwc, -jnp.inf, jax.lax.max,
        window_dimensions=(1, k, k, 1), window_strides=(1, 1, 1, 1),
        padding=((0, 0), (p, p), (p, p), (0, 0)),
    )


def spp_reference(x_nchw, params):
    x = jnp.transpose(x_nchw, (0, 2, 3, 1))
    s1, b1 = fold_bn(*params["bn1"])
    y = _hardswish(x @ params["w1"] * s1 + b1)
    cat = jnp.concatenate([y] + [_ref_pool(y, k) for k in (5, 9, 13)], axis=-1)
    s2, b2 = fold_bn(*params["bn2"])
    out = _hardswish(cat @ params["w2"] * s2 + b2)
    return out.transpose(0, 3, 1, 2)


# ---------------------------------------------------------------------------
if __name__ == "__main__":
    key = jax.random.PRNGKey(0)
    N, C_IN, C_OUT, H, W = 2, 8, 8, 16, 16
    c_mid = C_IN // 2

    ks = jax.random.split(key, 12)
    x = jax.random.normal(ks[0], (N, C_IN, H, W), dtype=jnp.float32)

    params = {
        # conv1 weight: torch (c_mid, c_in, 1, 1) -> stored as (c_in, c_mid)
        "w1": jax.random.normal(ks[1], (C_IN, c_mid), jnp.float32) * 0.3,
        "bn1": (
            1.0 + 0.1 * jax.random.normal(ks[2], (c_mid,), jnp.float32),      # gamma
            0.1 * jax.random.normal(ks[3], (c_mid,), jnp.float32),            # beta
            0.1 * jax.random.normal(ks[4], (c_mid,), jnp.float32),            # running_mean
            jnp.abs(jax.random.normal(ks[5], (c_mid,), jnp.float32)) + 0.5,   # running_var
        ),
        # conv2 weight: torch (c_out, 2*c_in, 1, 1) -> stored as (2*c_in, c_out)
        "w2": jax.random.normal(ks[6], (2 * C_IN, C_OUT), jnp.float32) * 0.3,
        "bn2": (
            1.0 + 0.1 * jax.random.normal(ks[7], (C_OUT,), jnp.float32),
            0.1 * jax.random.normal(ks[8], (C_OUT,), jnp.float32),
            0.1 * jax.random.normal(ks[9], (C_OUT,), jnp.float32),
            jnp.abs(jax.random.normal(ks[10], (C_OUT,), jnp.float32)) + 0.5,
        ),
    }

    out = jax.block_until_ready(spp_forward(x, params))
    ref = jax.block_until_ready(spp_reference(x, params))

    assert out.shape == (N, C_OUT, H, W), out.shape
    np.testing.assert_allclose(np.asarray(out), np.asarray(ref), rtol=1e-4, atol=1e-4)
    print("KERNEL_OK")
</pallas_src>

<mosaic_0001>
module attributes {stable_mosaic.version = 11 : i64} {
  func.func @pw_conv_bn_hswish_kernel(%arg0: i32, %arg1: memref<256x8xf32, #tpu.memory_space<vmem>>, %arg2: memref<8x4xf32, #tpu.memory_space<vmem>>, %arg3: memref<1x4xf32, #tpu.memory_space<vmem>>, %arg4: memref<256x4xf32, #tpu.memory_space<vmem>>) attributes {dimension_semantics = [#tpu.dimension_semantics<parallel>], iteration_bounds = array<i64: 2>, scalar_prefetch = 0 : i64, scratch_operands = 0 : i64, tpu.core_type = #tpu.core_type<tc>, window_params = [{transform_indices = @transform_0, window_bounds = array<i64: 256, 8>}, {pipeline_mode = #tpu.pipeline_mode<synchronous>, transform_indices = @transform_1, window_bounds = array<i64: 8, 4>}, {pipeline_mode = #tpu.pipeline_mode<synchronous>, transform_indices = @transform_2, window_bounds = array<i64: 1, 4>}, {transform_indices = @transform_3, window_bounds = array<i64: 256, 4>}]} {
    %c0 = arith.constant 0 : index
    %c0_0 = arith.constant 0 : index
    %0 = vector.load %arg1[%c0, %c0_0] : memref<256x8xf32, #tpu.memory_space<vmem>>, vector<256x8xf32>
    %c0_1 = arith.constant 0 : index
    %c0_2 = arith.constant 0 : index
    %1 = vector.load %arg2[%c0_1, %c0_2] : memref<8x4xf32, #tpu.memory_space<vmem>>, vector<8x4xf32>
    %cst = arith.constant dense<0.000000e+00> : vector<256x4xf32>
    %2 = tpu.matmul %0, %1, %cst {dimension_numbers = #tpu.dot_dimension_numbers<[1], [0], [0], [1], [0, 0, 1, 1], [], []>} : vector<256x8xf32>, vector<8x4xf32>, vector<256x4xf32> -> vector<256x4xf32>
    %c0_3 = arith.constant 0 : index
    %c0_4 = arith.constant 0 : index
    %3 = vector.load %arg3[%c0_3, %c0_4] : memref<1x4xf32, #tpu.memory_space<vmem>>, vector<1x4xf32>
    %4 = vector.broadcast %3 : vector<1x4xf32> to vector<256x4xf32>
    %5 = arith.addf %2, %4 : vector<256x4xf32>
    %cst_5 = arith.constant 3.000000e+00 : f32
    %6 = vector.broadcast %cst_5 : f32 to vector<256x4xf32>
    %7 = arith.addf %5, %6 : vector<256x4xf32>
    %cst_6 = arith.constant 0.000000e+00 : f32
    %cst_7 = arith.constant 6.000000e+00 : f32
    %8 = vector.broadcast %cst_6 : f32 to vector<256x4xf32>
    %9 = arith.maximumf %8, %7 : vector<256x4xf32>
    %10 = vector.broadcast %cst_7 : f32 to vector<256x4xf32>
    %11 = arith.minimumf %10, %9 : vector<256x4xf32>
    %12 = arith.mulf %5, %11 : vector<256x4xf32>
    %cst_8 = arith.constant 0.166666672 : f32
    %13 = vector.broadcast %cst_8 : f32 to vector<256x4xf32>
    %14 = arith.mulf %12, %13 : vector<256x4xf32>
    %c0_9 = arith.constant 0 : index
    %c0_10 = arith.constant 0 : index
    %15 = vector.load %arg4[%c0_9, %c0_10] : memref<256x4xf32, #tpu.memory_space<vmem>>, vector<256x4xf32>
    tpu.vector_store %arg4[%c0_9, %c0_10], %14 {strides = array<i32>} : memref<256x4xf32, #tpu.memory_space<vmem>>, vector<256x4xf32>,
    return
  }
  func.func @transform_0(%arg0: i32) -> (i32, i32) {
    %c0_i32 = arith.constant 0 : i32
    %c0_i32_0 = arith.constant 0 : i32
    return %arg0, %c0_i32 : i32, i32
  }
  func.func @transform_1(%arg0: i32) -> (i32, i32) {
    %c0_i32 = arith.constant 0 : i32
    %c0_i32_0 = arith.constant 0 : i32
    %c0_i32_1 = arith.constant 0 : i32
    return %c0_i32, %c0_i32_0 : i32, i32
  }
  func.func @transform_2(%arg0: i32) -> (i32, i32) {
    %c0_i32 = arith.constant 0 : i32
    %c0_i32_0 = arith.constant 0 : i32
    %c0_i32_1 = arith.constant 0 : i32
    return %c0_i32, %c0_i32_0 : i32, i32
  }
  func.func @transform_3(%arg0: i32) -> (i32, i32) {
    %c0_i32 = arith.constant 0 : i32
    %c0_i32_0 = arith.constant 0 : i32
    return %arg0, %c0_i32 : i32, i32
  }
}

</mosaic_0001>

<llo_original>
// kernel: tpu_custom_call.1
$region0: #{tpu_custom_call.1}
  #allocation0 [shape = 'u32[]', space=smem, size = 0x4, offset = 0x4, fixed_abs, tag = 'smem constant byte address 0x4 - core index']
  #allocation1 [shape = 'u32[72,128]{1,0:T(1,128)}', space=vmem, size = 0x9000, scoped, tag = 'internal scratch']
  %s0 = inlined_call_operand.vmem [shape: f32[512,8], index: 0, kind: input, shape index: {}]
  %s1 = inlined_call_operand.vmem [shape: f32[8,4], index: 1, kind: input, shape index: {}]
  %s2 = inlined_call_operand.vmem [shape: f32[1,4], index: 2, kind: input, shape index: {}]
  %s3 = inlined_call_operand.vmem [shape: f32[512,4], index: 3, kind: output, shape index: {}]
  %s4 = sld [smem:[#allocation0]]
  $region45: #{tpu_custom_call.1} parent=0
    _
  %s6 = ssub.s32 1, %s4
  %s7 = scalar_select 0, %s6, %s4
  loop: start=0, step=1, limit=4
  $region2: #{tpu_custom_call.1} parent=0 // loop_pre_header
    _
  $region3: #{tpu_custom_call.1} parent=0 // loop_header
    %s9 = sphi 0, %s13
    %p10 = scmp.ge.s32.totalorder %s9, 4
    %s19 = sphi 0, %s21
    %s22 = sphi 0, %s19
    %s23 = sphi 0, %s22
    %s39 = sphi 0, %s23
    %s43 = sphi 0, %s43
    %s45 = sphi 0, %s43
    %s46 = sphi 0, %s45
    %s60 = sphi 0, %s46
    %s64 = sphi 0, %s64
    %s66 = sphi 0, %s64
    %s67 = sphi 0, %s66
    %s81 = sphi 0, %s67
    %s87 = sphi 0, %s89
    %s90 = sphi 0, %s87
    %s91 = sphi 0, %s90
    %s107 = sphi 0, %s91
  $region4: #{tpu_custom_call.1} parent=0 // loop_header_branch
    %12 = sbr.rel (%p10) target = $region8
  $region5: #{tpu_custom_call.1} parent=0 // loop_body
    %s14 = ssub.s32 %s9, 1
    %s15 = ssub.s32 %s9, 2
    %s16 = sadd.s32 %s9, 1
    %s17 = ssub.s32 %s9, %s16
    %p18 = scmp.eq.s32.totalorder %s17, 0
    %s20 = sadd.s32 %s19, 1
    %s21 = scalar_select %p18, %s19, %s20
    %p24 = pneg %p18
    %p25 = scmp.eq.s32.totalorder %s9, 1
    %p26 = por %p24, %p25
    %p27 = scmp.ne.s32.totalorder %s19, %s22
    %p28 = scmp.eq.s32.totalorder %s9, 0
    %p29 = por %p27, %p28
    %p30 = scmp.ne.s32.totalorder %s19, %s22
    %p31 = scmp.eq.s32.totalorder %s14, 1
    %p32 = por %p30, %p31
    %p33 = scmp.ne.s32.totalorder %s22, %s23
    %p34 = scmp.eq.s32.totalorder %s14, 0
    %p35 = por %p33, %p34
    %p36 = scmp.ne.s32.totalorder %s22, %s23
    %p37 = scmp.eq.s32.totalorder %s15, 1
    %p38 = por %p36, %p37
    %p40 = scmp.ne.s32.totalorder %s23, %s39
    %p41 = scmp.eq.s32.totalorder %s15, 0
    %p42 = por %p40, %p41
    %s44 = sadd.s32 %s43, 1
    %p47 = scmp.eq.s32.totalorder %s9, 1
    %p48 = scmp.ne.s32.totalorder %s43, %s45
    %p49 = scmp.eq.s32.totalorder %s9, 0
    %p50 = por %p48, %p49
    %p51 = scmp.ne.s32.totalorder %s43, %s45
    %p52 = scmp.eq.s32.totalorder %s14, 1
    %p53 = por %p51, %p52
    %p54 = scmp.ne.s32.totalorder %s45, %s46
    %p55 = scmp.eq.s32.totalorder %s14, 0
    %p56 = por %p54, %p55
    %p57 = scmp.ne.s32.totalorder %s45, %s46
    %p58 = scmp.eq.s32.totalorder %s15, 1
    %p59 = por %p57, %p58
    %p61 = scmp.ne.s32.totalorder %s46, %s60
    %p62 = scmp.eq.s32.totalorder %s15, 0
    %p63 = por %p61, %p62
    %s65 = sadd.s32 %s64, 1
    %p68 = scmp.eq.s32.totalorder %s9, 1
    %p69 = scmp.ne.s32.totalorder %s64, %s66
    %p70 = scmp.eq.s32.totalorder %s9, 0
    %p71 = por %p69, %p70
    %p72 = scmp.ne.s32.totalorder %s64, %s66
    %p73 = scmp.eq.s32.totalorder %s14, 1
    %p74 = por %p72, %p73
    %p75 = scmp.ne.s32.totalorder %s66, %s67
    %p76 = scmp.eq.s32.totalorder %s14, 0
    %p77 = por %p75, %p76
    %p78 = scmp.ne.s32.totalorder %s66, %s67
    %p79 = scmp.eq.s32.totalorder %s15, 1
    %p80 = por %p78, %p79
    %p82 = scmp.ne.s32.totalorder %s67, %s81
    %p83 = scmp.eq.s32.totalorder %s15, 0
    %p84 = por %p82, %p83
    %s85 = ssub.s32 %s9, %s16
    %p86 = scmp.eq.s32.totalorder %s85, 0
    %s88 = sadd.s32 %s87, 1
    %s89 = scalar_select %p86, %s87, %s88
    %p92 = pneg %p86
    %p93 = scmp.eq.s32.totalorder %s9, 1
    %p94 = por %p92, %p93
    %p95 = scmp.ne.s32.totalorder %s87, %s90
    %p96 = scmp.eq.s32.totalorder %s9, 0
    %p97 = por %p95, %p96
    %p98 = scmp.ne.s32.totalorder %s87, %s90
    %p99 = scmp.eq.s32.totalorder %s14, 1
    %p100 = por %p98, %p99
    %p101 = scmp.ne.s32.totalorder %s90, %s91
    %p102 = scmp.eq.s32.totalorder %s14, 0
    %p103 = por %p101, %p102
    %p104 = scmp.ne.s32.totalorder %s90, %s91
    %p105 = scmp.eq.s32.totalorder %s15, 1
    %p106 = por %p104, %p105
    %p108 = scmp.ne.s32.totalorder %s91, %s107
    %p109 = scmp.eq.s32.totalorder %s15, 0
    %p110 = por %p108, %p109
    %p111 = scmp.le.s32.totalorder 1, %s9
    %p112 = scmp.lt.s32.totalorder %s9, 3
    %p113 = pnand %p111, %p112
    %p114 = pneg %p113
    // Predicated region
    $region9: #{tpu_custom_call.1} parent=5 // pred_check
      _
    $region10: #{tpu_custom_call.1} parent=5 // pred_check_branch
      %116 = sbr.rel (%p113) target = $region12
    $region11: #{tpu_custom_call.1} parent=5 // pred_region
      %s117 = ssub.s32 %s9, 1
      // Predicated region
      $region13: #{tpu_custom_call.1} parent=11 // pred_check
        %p118 = pneg %p56
      $region14: #{tpu_custom_call.1} parent=11 // pred_check_branch
        %120 = sbr.rel (%p118) target = $region16
      $region15: #{tpu_custom_call.1} parent=11 // pred_region
        _
      $region16: #{tpu_custom_call.1} parent=11 // pred_fallthru
        _
      // Predicated region
      $region17: #{tpu_custom_call.1} parent=11 // pred_check
        %p121 = pneg %p77
      $region18: #{tpu_custom_call.1} parent=11 // pred_check_branch
        %123 = sbr.rel (%p121) target = $region20
      $region19: #{tpu_custom_call.1} parent=11 // pred_region
        _
      $region20: #{tpu_custom_call.1} parent=11 // pred_fallthru
        _
    $region12: #{tpu_custom_call.1} parent=5 // pred_fallthru
      _
    %p124 = scmp.lt.s32.totalorder %s9, 2
    // Predicated region
    $region21: #{tpu_custom_call.1} parent=5 // pred_check
      %p125 = pneg %p124
    $region22: #{tpu_custom_call.1} parent=5 // pred_check_branch
      %127 = sbr.rel (%p125) target = $region24
    $region23: #{tpu_custom_call.1} parent=5 // pred_region
      // Predicated region
      $region25: #{tpu_custom_call.1} parent=23 // pred_check
        %p128 = pneg %p29
      $region26: #{tpu_custom_call.1} parent=23 // pred_check_branch
        %130 = sbr.rel (%p128) target = $region28
      $region27: #{tpu_custom_call.1} parent=23 // pred_region
        %s131 = smul.u32 32, %s9
        %p132 = scmp.lt.s32.totalorder %s131, 63
        %s133 = scalar_select %p132, %s131, 63
        %s134 = smul.addr %s133, 8
        %s135 = scalar_lea.vmem %s0, %s134
        %s136 = smul.u32 32, %s9
      $region28: #{tpu_custom_call.1} parent=23 // pred_fallthru
        _
    $region24: #{tpu_custom_call.1} parent=5 // pred_fallthru
      _
    %p137 = scmp.le.s32.totalorder 1, %s9
    %p138 = scmp.lt.s32.totalorder %s9, 3
    %p139 = pnand %p137, %p138
    %p140 = pneg %p139
    // Predicated region
    $region29: #{tpu_custom_call.1} parent=5 // pred_check
      _
    $region30: #{tpu_custom_call.1} parent=5 // pred_check_branch
      %142 = sbr.rel (%p139) target = $region32
    $region31: #{tpu_custom_call.1} parent=5 // pred_region
      %s143 = ssub.s32 %s9, 1
      %s144 = smul.u32 32, %s14
      %p145 = scmp.lt.s32.totalorder %s144, 63
      %s146 = scalar_select %p145, %s144, 63
      %s147 = smul.addr %s146, 8
      %s148 = scalar_lea.vmem %s0, %s147
      %p149 = pneg %p35
      %p150 = pneg %p32
      %p151 = pneg %p56
      %p152 = pneg %p53
      %p153 = pneg %p77
      %p154 = pneg %p74
      %p155 = pneg %p103
      %p156 = pneg %p100
      %s157 = smul.u32 32, %s14
      %p158 = scmp.lt.s32.totalorder %s157, 63
      %s159 = scalar_select %p158, %s157, 63
      %s160 = smul.addr %s159, 8
      %s161 = scalar_lea.vmem %s3, %s160
      %s162 = smul.u32 32, %s14
      %p163 = scmp.lt.s32.totalorder %s162, 63
      %s164 = scalar_select %p163, %s162, 63
      %s165 = smul.addr %s164, 8
      %s166 = scalar_lea.vmem %s0, %s165
      %s167 = smul.u32 32, %s14
      %s168 = smul.u32 32, %s14
      %p169 = scmp.lt.s32.totalorder %s168, 63
      %s170 = scalar_select %p169, %s168, 63
      %s171 = smul.addr %s170, 8
      %s172 = scalar_lea.vmem %s3, %s171
      %s173 = smul.u32 32, %s14
      %v174 = vld [vmem:[%s166] sm:$0xff]
      %v175 = vld [vmem:[%s166 + $0x8] sm:$0xff]
      %v176 = vld [vmem:[%s166 + $0x10] sm:$0xff]
      %v177 = vld [vmem:[%s166 + $0x18] sm:$0xff]
      %v178 = vld [vmem:[%s166 + $0x20] sm:$0xff]
      %v179 = vld [vmem:[%s166 + $0x28] sm:$0xff]
      %v180 = vld [vmem:[%s166 + $0x30] sm:$0xff]
      %v181 = vld [vmem:[%s166 + $0x38] sm:$0xff]
      %v182 = vld [vmem:[%s166 + $0x40] sm:$0xff]
      %v183 = vld [vmem:[%s166 + $0x48] sm:$0xff]
      %v184 = vld [vmem:[%s166 + $0x50] sm:$0xff]
      %v185 = vld [vmem:[%s166 + $0x58] sm:$0xff]
      %v186 = vld [vmem:[%s166 + $0x60] sm:$0xff]
      %v187 = vld [vmem:[%s166 + $0x68] sm:$0xff]
      %v188 = vld [vmem:[%s166 + $0x70] sm:$0xff]
      %v189 = vld [vmem:[%s166 + $0x78] sm:$0xff]
      %v190 = vld [vmem:[%s166 + $0x80] sm:$0xff]
      %v191 = vld [vmem:[%s166 + $0x88] sm:$0xff]
      %v192 = vld [vmem:[%s166 + $0x90] sm:$0xff]
      %v193 = vld [vmem:[%s166 + $0x98] sm:$0xff]
      %v194 = vld [vmem:[%s166 + $0xa0] sm:$0xff]
      %v195 = vld [vmem:[%s166 + $0xa8] sm:$0xff]
      %v196 = vld [vmem:[%s166 + $0xb0] sm:$0xff]
      %v197 = vld [vmem:[%s166 + $0xb8] sm:$0xff]
      %v198 = vld [vmem:[%s166 + $0xc0] sm:$0xff]
      %v199 = vld [vmem:[%s166 + $0xc8] sm:$0xff]
      %v200 = vld [vmem:[%s166 + $0xd0] sm:$0xff]
      %v201 = vld [vmem:[%s166 + $0xd8] sm:$0xff]
      %v202 = vld [vmem:[%s166 + $0xe0] sm:$0xff]
      %v203 = vld [vmem:[%s166 + $0xe8] sm:$0xff]
      %v204 = vld [vmem:[%s166 + $0xf0] sm:$0xff]
      %v205 = vld [vmem:[%s166 + $0xf8] sm:$0xff]
      %v206 = vld [vmem:[%s1] sm:$0xff]
      %v207 = vld [vmem:[%s2] sm:$0x1]
      %v209 = vperm.slane %v207, 0
      %vm211 = vcmask 64512
      %v213 = vsel %vm211, %v174, 0
      %v216 = vsel %vm211, %v175, 0
      %v219 = vsel %vm211, %v176, 0
      %v222 = vsel %vm211, %v177, 0
      %v225 = vsel %vm211, %v178, 0
      %v228 = vsel %vm211, %v179, 0
      %v231 = vsel %vm211, %v180, 0
      %v234 = vsel %vm211, %v181, 0
      %v237 = vsel %vm211, %v182, 0
      %v240 = vsel %vm211, %v183, 0
      %v243 = vsel %vm211, %v184, 0
      %v246 = vsel %vm211, %v185, 0
      %v249 = vsel %vm211, %v186, 0
      %v252 = vsel %vm211, %v187, 0
      %v255 = vsel %vm211, %v188, 0
      %v258 = vsel %vm211, %v189, 0
      %v261 = vsel %vm211, %v190, 0
      %v264 = vsel %vm211, %v191, 0
      %v267 = vsel %vm211, %v192, 0
      %v270 = vsel %vm211, %v193, 0
      %v273 = vsel %vm211, %v194, 0
      %v276 = vsel %vm211, %v195, 0
      %v279 = vsel %vm211, %v196, 0
      %v282 = vsel %vm211, %v197, 0
      %v285 = vsel %vm211, %v198, 0
      %v288 = vsel %vm211, %v199, 0
      %v291 = vsel %vm211, %v200, 0
      %v294 = vsel %vm211, %v201, 0
      %v297 = vsel %vm211, %v202, 0
      %v300 = vsel %vm211, %v203, 0
      %v303 = vsel %vm211, %v204, 0
      %v306 = vsel %vm211, %v205, 0
      %308 = vmatpush.msra.mxu0 0.0
      %309 = vmatpush.msra.mxu0 0.0
      %310 = vmatpush.msra.mxu0 0.0
      %311 = vmatpush.msra.mxu0 0.0
      %312 = vmatpush.msra.mxu0 0.0
      %313 = vmatpush.msra.mxu0 0.0
      %314 = vmatpush.msra.mxu0 0.0
      %315 = vmatpush.msra.mxu0 0.0
      %316 = vmatpush.msra.mxu0 0.0
      %317 = vmatpush.msra.mxu0 0.0
      %318 = vmatpush.msra.mxu0 0.0
      %319 = vmatpush.msra.mxu0 0.0
      %320 = vmatpush.msra.mxu0 0.0
      %321 = vmatpush.msra.mxu0 0.0
      %322 = vmatpush.msra.mxu0 0.0
      %323 = vmatpush.msra.mxu0 %v206
      %324 = vmatmul.f32.gmra.mxu0 %v213
      %v325 = vpop.f32.mrf.mxu0
      %v326 = vadd.f32 %v209, %v325
      %327 = vmatmul.f32.gmra.mxu0 %v216
      %v328 = vpop.f32.mrf.mxu0
      %v329 = vadd.f32 %v209, %v328
      %330 = vmatmul.f32.gmra.mxu0 %v219
      %v331 = vpop.f32.mrf.mxu0
      %v332 = vadd.f32 %v209, %v331
      %333 = vmatmul.f32.gmra.mxu0 %v222
      %v334 = vpop.f32.mrf.mxu0
      %v335 = vadd.f32 %v209, %v334
      %336 = vmatmul.f32.gmra.mxu0 %v225
      %v337 = vpop.f32.mrf.mxu0
      %v338 = vadd.f32 %v209, %v337
      %339 = vmatmul.f32.gmra.mxu0 %v228
      %v340 = vpop.f32.mrf.mxu0
      %v341 = vadd.f32 %v209, %v340
      %342 = vmatmul.f32.gmra.mxu0 %v231
      %v343 = vpop.f32.mrf.mxu0
      %v344 = vadd.f32 %v209, %v343
      %345 = vmatmul.f32.gmra.mxu0 %v234
      %v346 = vpop.f32.mrf.mxu0
      %v347 = vadd.f32 %v209, %v346
      %348 = vmatmul.f32.gmra.mxu0 %v237
      %v349 = vpop.f32.mrf.mxu0
      %v350 = vadd.f32 %v209, %v349
      %351 = vmatmul.f32.gmra.mxu0 %v240
      %v352 = vpop.f32.mrf.mxu0
      %v353 = vadd.f32 %v209, %v352
      %354 = vmatmul.f32.gmra.mxu0 %v243
      %v355 = vpop.f32.mrf.mxu0
      %v356 = vadd.f32 %v209, %v355
      %357 = vmatmul.f32.gmra.mxu0 %v246
      %v358 = vpop.f32.mrf.mxu0
      %v359 = vadd.f32 %v209, %v358
      %360 = vmatmul.f32.gmra.mxu0 %v249
      %v361 = vpop.f32.mrf.mxu0
      %v362 = vadd.f32 %v209, %v361
      %363 = vmatmul.f32.gmra.mxu0 %v252
      %v364 = vpop.f32.mrf.mxu0
      %v365 = vadd.f32 %v209, %v364
      %366 = vmatmul.f32.gmra.mxu0 %v255
      %v367 = vpop.f32.mrf.mxu0
      %v368 = vadd.f32 %v209, %v367
      %369 = vmatmul.f32.gmra.mxu0 %v258
      %v370 = vpop.f32.mrf.mxu0
      %v371 = vadd.f32 %v209, %v370
      %372 = vmatmul.f32.gmra.mxu0 %v261
      %v373 = vpop.f32.mrf.mxu0
      %v374 = vadd.f32 %v209, %v373
      %375 = vmatmul.f32.gmra.mxu0 %v264
      %v376 = vpop.f32.mrf.mxu0
      %v377 = vadd.f32 %v209, %v376
      %378 = vmatmul.f32.gmra.mxu0 %v267
      %v379 = vpop.f32.mrf.mxu0
      %v380 = vadd.f32 %v209, %v379
      %381 = vmatmul.f32.gmra.mxu0 %v270
      %v382 = vpop.f32.mrf.mxu0
      %v383 = vadd.f32 %v209, %v382
      %384 = vmatmul.f32.gmra.mxu0 %v273
      %v385 = vpop.f32.mrf.mxu0
      %v386 = vadd.f32 %v209, %v385
      %387 = vmatmul.f32.gmra.mxu0 %v276
      %v388 = vpop.f32.mrf.mxu0
      %v389 = vadd.f32 %v209, %v388
      %390 = vmatmul.f32.gmra.mxu0 %v279
      %v391 = vpop.f32.mrf.mxu0
      %v392 = vadd.f32 %v209, %v391
      %393 = vmatmul.f32.gmra.mxu0 %v282
      %v394 = vpop.f32.mrf.mxu0
      %v395 = vadd.f32 %v209, %v394
      %396 = vmatmul.f32.gmra.mxu0 %v285
      %v397 = vpop.f32.mrf.mxu0
      %v398 = vadd.f32 %v209, %v397
      %399 = vmatmul.f32.gmra.mxu0 %v288
      %v400 = vpop.f32.mrf.mxu0
      %v401 = vadd.f32 %v209, %v400
      %402 = vmatmul.f32.gmra.mxu0 %v291
      %v403 = vpop.f32.mrf.mxu0
      %v404 = vadd.f32 %v209, %v403
      %405 = vmatmul.f32.gmra.mxu0 %v294
      %v406 = vpop.f32.mrf.mxu0
      %v407 = vadd.f32 %v209, %v406
      %408 = vmatmul.f32.gmra.mxu0 %v297
      %v409 = vpop.f32.mrf.mxu0
      %v410 = vadd.f32 %v209, %v409
      %411 = vmatmul.f32.gmra.mxu0 %v300
      %v412 = vpop.f32.mrf.mxu0
      %v413 = vadd.f32 %v209, %v412
      %414 = vmatmul.f32.gmra.mxu0 %v303
      %v415 = vpop.f32.mrf.mxu0
      %v416 = vadd.f32 %v209, %v415
      %417 = vmatmul.f32.gmra.mxu0 %v306
      %v418 = vpop.f32.mrf.mxu0
      %v419 = vadd.f32 %v209, %v418
      %420 = vdwg.mxu0
      %v421 = vadd.f32 %v326, 3.0
      %v422 = vadd.f32 %v329, 3.0
      %v423 = vadd.f32 %v332, 3.0
      %v424 = vadd.f32 %v335, 3.0
      %v425 = vadd.f32 %v338, 3.0
      %v426 = vadd.f32 %v341, 3.0
      %v427 = vadd.f32 %v344, 3.0
      %v428 = vadd.f32 %v347, 3.0
      %v429 = vadd.f32 %v350, 3.0
      %v430 = vadd.f32 %v353, 3.0
      %v431 = vadd.f32 %v356, 3.0
      %v432 = vadd.f32 %v359, 3.0
      %v433 = vadd.f32 %v362, 3.0
      %v434 = vadd.f32 %v365, 3.0
      %v435 = vadd.f32 %v368, 3.0
      %v436 = vadd.f32 %v371, 3.0
      %v437 = vadd.f32 %v374, 3.0
      %v438 = vadd.f32 %v377, 3.0
      %v439 = vadd.f32 %v380, 3.0
      %v440 = vadd.f32 %v383, 3.0
      %v441 = vadd.f32 %v386, 3.0
      %v442 = vadd.f32 %v389, 3.0
      %v443 = vadd.f32 %v392, 3.0
      %v444 = vadd.f32 %v395, 3.0
      %v445 = vadd.f32 %v398, 3.0
      %v446 = vadd.f32 %v401, 3.0
      %v447 = vadd.f32 %v404, 3.0
      %v448 = vadd.f32 %v407, 3.0
      %v449 = vadd.f32 %v410, 3.0
      %v450 = vadd.f32 %v413, 3.0
      %v451 = vadd.f32 %v416, 3.0
      %v452 = vadd.f32 %v419, 3.0
      %v453 = vmax.f32 %v421, 0.0
      %v454 = vmax.f32 %v422, 0.0
      %v455 = vmax.f32 %v423, 0.0
      %v456 = vmax.f32 %v424, 0.0
      %v457 = vmax.f32 %v425, 0.0
      %v458 = vmax.f32 %v426, 0.0
      %v459 = vmax.f32 %v427, 0.0
      %v460 = vmax.f32 %v428, 0.0
      %v461 = vmax.f32 %v429, 0.0
      %v462 = vmax.f32 %v430, 0.0
      %v463 = vmax.f32 %v431, 0.0
      %v464 = vmax.f32 %v432, 0.0
      %v465 = vmax.f32 %v433, 0.0
      %v466 = vmax.f32 %v434, 0.0
      %v467 = vmax.f32 %v435, 0.0
      %v468 = vmax.f32 %v436, 0.0
      %v469 = vmax.f32 %v437, 0.0
      %v470 = vmax.f32 %v438, 0.0
      %v471 = vmax.f32 %v439, 0.0
      %v472 = vmax.f32 %v440, 0.0
      %v473 = vmax.f32 %v441, 0.0
      %v474 = vmax.f32 %v442, 0.0
      %v475 = vmax.f32 %v443, 0.0
      %v476 = vmax.f32 %v444, 0.0
      %v477 = vmax.f32 %v445, 0.0
      %v478 = vmax.f32 %v446, 0.0
      %v479 = vmax.f32 %v447, 0.0
      %v480 = vmax.f32 %v448, 0.0
      %v481 = vmax.f32 %v449, 0.0
      %v482 = vmax.f32 %v450, 0.0
      %v483 = vmax.f32 %v451, 0.0
      %v484 = vmax.f32 %v452, 0.0
      %v485 = vmin.f32 %v453, 6.0
      %v486 = vmin.f32 %v454, 6.0
      %v487 = vmin.f32 %v455, 6.0
      %v488 = vmin.f32 %v456, 6.0
      %v489 = vmin.f32 %v457, 6.0
      %v490 = vmin.f32 %v458, 6.0
      %v491 = vmin.f32 %v459, 6.0
      %v492 = vmin.f32 %v460, 6.0
      %v493 = vmin.f32 %v461, 6.0
      %v494 = vmin.f32 %v462, 6.0
      %v495 = vmin.f32 %v463, 6.0
      %v496 = vmin.f32 %v464, 6.0
      %v497 = vmin.f32 %v465, 6.0
      %v498 = vmin.f32 %v466, 6.0
      %v499 = vmin.f32 %v467, 6.0
      %v500 = vmin.f32 %v468, 6.0
      %v501 = vmin.f32 %v469, 6.0
      %v502 = vmin.f32 %v470, 6.0
      %v503 = vmin.f32 %v471, 6.0
      %v504 = vmin.f32 %v472, 6.0
      %v505 = vmin.f32 %v473, 6.0
      %v506 = vmin.f32 %v474, 6.0
      %v507 = vmin.f32 %v475, 6.0
      %v508 = vmin.f32 %v476, 6.0
      %v509 = vmin.f32 %v477, 6.0
      %v510 = vmin.f32 %v478, 6.0
      %v511 = vmin.f32 %v479, 6.0
      %v512 = vmin.f32 %v480, 6.0
      %v513 = vmin.f32 %v481, 6.0
      %v514 = vmin.f32 %v482, 6.0
      %v515 = vmin.f32 %v483, 6.0
      %v516 = vmin.f32 %v484, 6.0
      %v517 = vmul.f32 %v326, %v485
      %v518 = vmul.f32 %v329, %v486
      %v519 = vmul.f32 %v332, %v487
      %v520 = vmul.f32 %v335, %v488
      %v521 = vmul.f32 %v338, %v489
      %v522 = vmul.f32 %v341, %v490
      %v523 = vmul.f32 %v344, %v491
      %v524 = vmul.f32 %v347, %v492
      %v525 = vmul.f32 %v350, %v493
      %v526 = vmul.f32 %v353, %v494
      %v527 = vmul.f32 %v356, %v495
      %v528 = vmul.f32 %v359, %v496
      %v529 = vmul.f32 %v362, %v497
      %v530 = vmul.f32 %v365, %v498
      %v531 = vmul.f32 %v368, %v499
      %v532 = vmul.f32 %v371, %v500
      %v533 = vmul.f32 %v374, %v501
      %v534 = vmul.f32 %v377, %v502
      %v535 = vmul.f32 %v380, %v503
      %v536 = vmul.f32 %v383, %v504
      %v537 = vmul.f32 %v386, %v505
      %v538 = vmul.f32 %v389, %v506
      %v539 = vmul.f32 %v392, %v507
      %v540 = vmul.f32 %v395, %v508
      %v541 = vmul.f32 %v398, %v509
      %v542 = vmul.f32 %v401, %v510
      %v543 = vmul.f32 %v404, %v511
      %v544 = vmul.f32 %v407, %v512
      %v545 = vmul.f32 %v410, %v513
      %v546 = vmul.f32 %v413, %v514
      %v547 = vmul.f32 %v416, %v515
      %v548 = vmul.f32 %v419, %v516
      %v549 = vmul.f32 %v517, 0.16666667
      %v550 = vmul.f32 %v518, 0.16666667
      %v551 = vmul.f32 %v519, 0.16666667
      %v552 = vmul.f32 %v520, 0.16666667
      %v553 = vmul.f32 %v521, 0.16666667
      %v554 = vmul.f32 %v522, 0.16666667
      %v555 = vmul.f32 %v523, 0.16666667
      %v556 = vmul.f32 %v524, 0.16666667
      %v557 = vmul.f32 %v525, 0.16666667
      %v558 = vmul.f32 %v526, 0.16666667
      %v559 = vmul.f32 %v527, 0.16666667
      %v560 = vmul.f32 %v528, 0.16666667
      %v561 = vmul.f32 %v529, 0.16666667
      %v562 = vmul.f32 %v530, 0.16666667
      %v563 = vmul.f32 %v531, 0.16666667
      %v564 = vmul.f32 %v532, 0.16666667
      %v565 = vmul.f32 %v533, 0.16666667
      %v566 = vmul.f32 %v534, 0.16666667
      %v567 = vmul.f32 %v535, 0.16666667
      %v568 = vmul.f32 %v536, 0.16666667
      %v569 = vmul.f32 %v537, 0.16666667
      %v570 = vmul.f32 %v538, 0.16666667
      %v571 = vmul.f32 %v539, 0.16666667
      %v572 = vmul.f32 %v540, 0.16666667
      %v573 = vmul.f32 %v541, 0.16666667
      %v574 = vmul.f32 %v542, 0.16666667
      %v575 = vmul.f32 %v543, 0.16666667
      %v576 = vmul.f32 %v544, 0.16666667
      %v577 = vmul.f32 %v545, 0.16666667
      %v578 = vmul.f32 %v546, 0.16666667
      %v579 = vmul.f32 %v547, 0.16666667
      %v580 = vmul.f32 %v548, 0.16666667
      %vm581 = vcmask 31744
      %582 = vst.msk [vmem:[%s172] sm:$0xff] %vm581, %v549
      %583 = vst.msk [vmem:[%s172 + $0x8] sm:$0xff] %vm581, %v550
      %584 = vst.msk [vmem:[%s172 + $0x10] sm:$0xff] %vm581, %v551
      %585 = vst.msk [vmem:[%s172 + $0x18] sm:$0xff] %vm581, %v552
      %586 = vst.msk [vmem:[%s172 + $0x20] sm:$0xff] %vm581, %v553
      %587 = vst.msk [vmem:[%s172 + $0x28] sm:$0xff] %vm581, %v554
      %588 = vst.msk [vmem:[%s172 + $0x30] sm:$0xff] %vm581, %v555
      %589 = vst.msk [vmem:[%s172 + $0x38] sm:$0xff] %vm581, %v556
      %590 = vst.msk [vmem:[%s172 + $0x40] sm:$0xff] %vm581, %v557
      %591 = vst.msk [vmem:[%s172 + $0x48] sm:$0xff] %vm581, %v558
      %592 = vst.msk [vmem:[%s172 + $0x50] sm:$0xff] %vm581, %v559
      %593 = vst.msk [vmem:[%s172 + $0x58] sm:$0xff] %vm581, %v560
      %594 = vst.msk [vmem:[%s172 + $0x60] sm:$0xff] %vm581, %v561
      %595 = vst.msk [vmem:[%s172 + $0x68] sm:$0xff] %vm581, %v562
      %596 = vst.msk [vmem:[%s172 + $0x70] sm:$0xff] %vm581, %v563
      %597 = vst.msk [vmem:[%s172 + $0x78] sm:$0xff] %vm581, %v564
      %598 = vst.msk [vmem:[%s172 + $0x80] sm:$0xff] %vm581, %v565
      %599 = vst.msk [vmem:[%s172 + $0x88] sm:$0xff] %vm581, %v566
      %600 = vst.msk [vmem:[%s172 + $0x90] sm:$0xff] %vm581, %v567
      %601 = vst.msk [vmem:[%s172 + $0x98] sm:$0xff] %vm581, %v568
      %602 = vst.msk [vmem:[%s172 + $0xa0] sm:$0xff] %vm581, %v569
      %603 = vst.msk [vmem:[%s172 + $0xa8] sm:$0xff] %vm581, %v570
      %604 = vst.msk [vmem:[%s172 + $0xb0] sm:$0xff] %vm581, %v571
      %605 = vst.msk [vmem:[%s172 + $0xb8] sm:$0xff] %vm581, %v572
      %606 = vst.msk [vmem:[%s172 + $0xc0] sm:$0xff] %vm581, %v573
      %607 = vst.msk [vmem:[%s172 + $0xc8] sm:$0xff] %vm581, %v574
      %608 = vst.msk [vmem:[%s172 + $0xd0] sm:$0xff] %vm581, %v575
      %609 = vst.msk [vmem:[%s172 + $0xd8] sm:$0xff] %vm581, %v576
      %610 = vst.msk [vmem:[%s172 + $0xe0] sm:$0xff] %vm581, %v577
      %611 = vst.msk [vmem:[%s172 + $0xe8] sm:$0xff] %vm581, %v578
      %612 = vst.msk [vmem:[%s172 + $0xf0] sm:$0xff] %vm581, %v579
      %613 = vst.msk [vmem:[%s172 + $0xf8] sm:$0xff] %vm581, %v580
      %s614 = smul.u32 32, %s14
      %p615 = scmp.lt.s32.totalorder %s614, 63
      %s616 = scalar_select %p615, %s614, 63
      %s617 = smul.addr %s616, 8
      %s618 = scalar_lea.vmem %s3, %s617
      // Predicated region
      $region33: #{tpu_custom_call.1} parent=31 // pred_check
        %p619 = pneg %p100
      $region34: #{tpu_custom_call.1} parent=31 // pred_check_branch
        %621 = sbr.rel (%p619) target = $region36
      $region35: #{tpu_custom_call.1} parent=31 // pred_region
        %s622 = smul.u32 32, %s14
      $region36: #{tpu_custom_call.1} parent=31 // pred_fallthru
        _
    $region32: #{tpu_custom_call.1} parent=5 // pred_fallthru
      _
    %p623 = scmp.le.s32.totalorder 2, %s9
    // Predicated region
    $region37: #{tpu_custom_call.1} parent=5 // pred_check
      %p624 = pneg %p623
    $region38: #{tpu_custom_call.1} parent=5 // pred_check_branch
      %626 = sbr.rel (%p624) target = $region40
    $region39: #{tpu_custom_call.1} parent=5 // pred_region
      %s627 = ssub.s32 %s9, 2
      // Predicated region
      $region41: #{tpu_custom_call.1} parent=39 // pred_check
        %p628 = pneg %p106
      $region42: #{tpu_custom_call.1} parent=39 // pred_check_branch
        %630 = sbr.rel (%p628) target = $region44
      $region43: #{tpu_custom_call.1} parent=39 // pred_region
        %s631 = smul.u32 32, %s15
        %p632 = scmp.lt.s32.totalorder %s631, 63
        %s633 = scalar_select %p632, %s631, 63
        %s634 = smul.addr %s633, 8
        %s635 = scalar_lea.vmem %s3, %s634
      $region44: #{tpu_custom_call.1} parent=39 // pred_fallthru
        _
    $region40: #{tpu_custom_call.1} parent=5 // pred_fallthru
      _
  $region6: #{tpu_custom_call.1} parent=0 // loop_footer
    %s13 = sadd.s32 1, %s9
  $region7: #{tpu_custom_call.1} parent=0 // loop_footer_branch
    %8 = sbr.rel target = $region3
  $region8: #{tpu_custom_call.1} parent=0 // loop_exit
    _

</llo_original>
